<compile_context>
chip_gen: v7x
topology: tpu7x:2x2x1
jax: 0.10.0
libtpu: 0.0.40
codegen_flags: <defaults>
</compile_context>

<pallas_src>
import numpy as np
import jax
import jax.numpy as jnp
from jax import lax
from jax.experimental import pallas as pl
from jax.experimental.pallas import tpu as pltpu


def _mpcl_last_triplet_kernel(idx_ref, batch_ref, out_ref, slab_ref):
    # idx_ref : SMEM (R,) int32, rows = [anchor, positive, neg_0 .. neg_{K-1}]
    # batch_ref: VMEM (N, D)
    # out_ref : VMEM (1, 1) f32
    # slab_ref: VMEM (R, D) f32 scratch (stacked triplet rows)
    R = slab_ref.shape[0]  # R = 2 + K

    # In-kernel gather: copy the R triplet rows into one stacked slab.
    for r in range(R):  # static unroll, R is tiny (8 in the test)
        slab_ref[pl.ds(r, 1), :] = (
            batch_ref[pl.ds(idx_ref[r], 1), :].astype(jnp.float32))

    x = slab_ref[...]                                   # (R, D) f32
    a = x[0:1, :]                                       # (1, D) anchor row

    # One square + lane-reduce for every row's squared norm, one broadcast
    # multiply + lane-reduce for every anchor dot product.
    sq = jnp.sum(x * x, axis=-1, keepdims=True)         # (R, 1): ||row_r||^2
    dots = jnp.sum(a * x, axis=-1, keepdims=True)       # (R, 1): a . row_r

    # torch.nn.CosineSimilarity eps = 1e-8.  Clamping the squared-norm product
    # at eps^2 and taking rsqrt is exactly 1 / max(||a|| * ||b||, eps).
    # Single fused EUP rsqrt over all R products.
    prod = jnp.maximum(sq[0:1, :] * sq, jnp.float32(1e-16))   # (R, 1)
    cosines = dots * lax.rsqrt(prod)                           # (R, 1)

    cp = cosines[1:2, :]                                       # (1, 1) cos(a, p)
    cn = jnp.mean(cosines[2:R, :], axis=0, keepdims=True)      # (1, 1) mean_k cos(a, n_k)

    eps = jnp.float32(1e-7)
    l = jnp.clip((cp - cn - 1.0) ** 2, 0.0, 1.0 - eps)         # (1, 1)
    out_ref[...] = -jnp.log(1.0 - l)


@jax.jit
def mpcl_pallas_last(batch, idx):
    """batch: (N, D); idx: (R,) int32 = [anchor, positive, neg_0, ...].
    Returns the (1, 1) loss of that triplet in ONE fused dispatch."""
    _, D = batch.shape
    R = idx.shape[0]
    return pl.pallas_call(
        _mpcl_last_triplet_kernel,
        out_shape=jax.ShapeDtypeStruct((1, 1), jnp.float32),
        in_specs=[
            pl.BlockSpec(memory_space=pltpu.MemorySpace.SMEM),   # row indices
            pl.BlockSpec(memory_space=pltpu.MemorySpace.VMEM),   # whole batch
        ],
        out_specs=pl.BlockSpec(memory_space=pltpu.MemorySpace.VMEM),
        scratch_shapes=[pltpu.VMEM((R, D), jnp.float32)],
    )(idx, batch)


def npair_batchminer(labels, num_negs):
    """Deterministic 'npair'-style miner: for each sample with an available
    positive, anchor=i, positive=first other sample with same label,
    negatives=first `num_negs` samples with a different label."""
    labels = np.asarray(labels)
    anchors, positives, negatives = [], [], []
    for i in range(len(labels)):
        same = np.where(labels == labels[i])[0]
        same = same[same != i]
        if len(same) == 0:
            continue
        diff = np.where(labels != labels[i])[0]
        if len(diff) < num_negs:
            continue
        anchors.append(int(i))
        positives.append(int(same[0]))
        negatives.append([int(x) for x in diff[:num_negs]])
    return anchors, positives, negatives


def criterion_forward(batch, labels, num_negs=6):
    """Reproduces Criterion.forward: the PyTorch loop overwrites `loss` on
    every iteration, so only the LAST mined triplet's loss is returned.
    NOTE: if the module were ever meant to sum/mean over triplets (or a VJP
    through all triplets is needed), this shortcut must be revisited."""
    anchors, positives, negatives = npair_batchminer(labels, num_negs)
    if len(anchors) == 0:
        # Matches the PyTorch module: python int 0 when nothing is mined.
        return 0

    # Host-side mining produces the (2+K,) row-index vector; everything
    # device-side (gather + loss) runs inside the single jitted pallas_call.
    idx = np.concatenate(
        [np.asarray([anchors[-1], positives[-1]], dtype=np.int32),
         np.asarray(negatives[-1], dtype=np.int32)]).astype(np.int32)
    return mpcl_pallas_last(batch, jnp.asarray(idx))             # (1, 1)


def criterion_forward_ref(batch, labels, num_negs=6):
    """Pure-JAX reference, faithful to the PyTorch loop (computes every
    triplet, returns the last)."""
    anchors, positives, negatives = npair_batchminer(labels, num_negs)
    a = batch[np.asarray(anchors)]
    p = batch[np.asarray(positives)]
    n = batch[np.asarray(negatives)]
    cos_eps = 1e-8

    def cos(x, y):
        num = jnp.sum(x * y, axis=-1)
        den = jnp.maximum(
            jnp.linalg.norm(x, axis=-1) * jnp.linalg.norm(y, axis=-1), cos_eps
        )
        return num / den

    cp = cos(a, p)                                               # (T,)
    cn = jnp.mean(cos(a[:, None, :], n), axis=-1)                # (T,)
    l = jnp.clip((cp - cn - 1.0) ** 2, 0.0, 1.0 - 1e-7)
    l = -jnp.log(1.0 - l)
    return l[-1:, None]                                          # (1, 1)


if __name__ == "__main__":
    key = jax.random.PRNGKey(0)
    N, D = 8, 32                      # 8 samples, 32-dim embeddings
    num_negs = 6
    batch = jax.random.normal(key, (N, D), dtype=jnp.float32)
    labels = np.array([0, 0, 1, 1, 2, 2, 3, 3], dtype=np.int32)  # 4 classes x 2

    loss = criterion_forward(batch, labels, num_negs=num_negs)
    loss = jax.block_until_ready(loss)

    loss_ref = criterion_forward_ref(batch, labels, num_negs=num_negs)
    assert loss.shape == (1, 1)
    # rsqrt-on-squared-norms vs sqrt+divide differs by a few f32 ULPs on the
    # cosines; -log(1 - l) amplifies that near the clamp, so compare at 1e-3.
    np.testing.assert_allclose(np.asarray(loss), np.asarray(loss_ref),
                               rtol=1e-3, atol=1e-5)
    print("KERNEL_OK")
</pallas_src>

<mosaic_0001>
module attributes {stable_mosaic.version = 11 : i64} {
  func.func @_mpcl_last_triplet_kernel(%arg0: memref<8xi32, #tpu.memory_space<smem>>, %arg1: memref<8x32xf32, #tpu.memory_space<vmem>>, %arg2: memref<1x1xf32, #tpu.memory_space<vmem>>, %arg3: memref<8x32xf32, #tpu.memory_space<vmem>>) attributes {dimension_semantics = [], scalar_prefetch = 0 : i64, scratch_operands = 1 : i64, tpu.core_type = #tpu.core_type<tc>} {
    %c0 = arith.constant 0 : index
    %0 = memref.load %arg0[%c0] : memref<8xi32, #tpu.memory_space<smem>>
    %1 = arith.index_cast %0 : i32 to index
    %c0_0 = arith.constant 0 : index
    %2 = vector.load %arg1[%1, %c0_0] : memref<8x32xf32, #tpu.memory_space<vmem>>, vector<1x32xf32>
    %c0_1 = arith.constant 0 : index
    %c0_2 = arith.constant 0 : index
    %3 = vector.load %arg3[%c0_1, %c0_2] : memref<8x32xf32, #tpu.memory_space<vmem>>, vector<1x32xf32>
    tpu.vector_store %arg3[%c0_1, %c0_2], %2 {strides = array<i32>} : memref<8x32xf32, #tpu.memory_space<vmem>>, vector<1x32xf32>,
    %c1 = arith.constant 1 : index
    %4 = memref.load %arg0[%c1] : memref<8xi32, #tpu.memory_space<smem>>
    %5 = arith.index_cast %4 : i32 to index
    %c0_3 = arith.constant 0 : index
    %6 = vector.load %arg1[%5, %c0_3] : memref<8x32xf32, #tpu.memory_space<vmem>>, vector<1x32xf32>
    %c1_4 = arith.constant 1 : index
    %c0_5 = arith.constant 0 : index
    %7 = vector.load %arg3[%c1_4, %c0_5] : memref<8x32xf32, #tpu.memory_space<vmem>>, vector<1x32xf32>
    tpu.vector_store %arg3[%c1_4, %c0_5], %6 {strides = array<i32>} : memref<8x32xf32, #tpu.memory_space<vmem>>, vector<1x32xf32>,
    %c2 = arith.constant 2 : index
    %8 = memref.load %arg0[%c2] : memref<8xi32, #tpu.memory_space<smem>>
    %9 = arith.index_cast %8 : i32 to index
    %c0_6 = arith.constant 0 : index
    %10 = vector.load %arg1[%9, %c0_6] : memref<8x32xf32, #tpu.memory_space<vmem>>, vector<1x32xf32>
    %c2_7 = arith.constant 2 : index
    %c0_8 = arith.constant 0 : index
    %11 = vector.load %arg3[%c2_7, %c0_8] : memref<8x32xf32, #tpu.memory_space<vmem>>, vector<1x32xf32>
    tpu.vector_store %arg3[%c2_7, %c0_8], %10 {strides = array<i32>} : memref<8x32xf32, #tpu.memory_space<vmem>>, vector<1x32xf32>,
    %c3 = arith.constant 3 : index
    %12 = memref.load %arg0[%c3] : memref<8xi32, #tpu.memory_space<smem>>
    %13 = arith.index_cast %12 : i32 to index
    %c0_9 = arith.constant 0 : index
    %14 = vector.load %arg1[%13, %c0_9] : memref<8x32xf32, #tpu.memory_space<vmem>>, vector<1x32xf32>
    %c3_10 = arith.constant 3 : index
    %c0_11 = arith.constant 0 : index
    %15 = vector.load %arg3[%c3_10, %c0_11] : memref<8x32xf32, #tpu.memory_space<vmem>>, vector<1x32xf32>
    tpu.vector_store %arg3[%c3_10, %c0_11], %14 {strides = array<i32>} : memref<8x32xf32, #tpu.memory_space<vmem>>, vector<1x32xf32>,
    %c4 = arith.constant 4 : index
    %16 = memref.load %arg0[%c4] : memref<8xi32, #tpu.memory_space<smem>>
    %17 = arith.index_cast %16 : i32 to index
    %c0_12 = arith.constant 0 : index
    %18 = vector.load %arg1[%17, %c0_12] : memref<8x32xf32, #tpu.memory_space<vmem>>, vector<1x32xf32>
    %c4_13 = arith.constant 4 : index
    %c0_14 = arith.constant 0 : index
    %19 = vector.load %arg3[%c4_13, %c0_14] : memref<8x32xf32, #tpu.memory_space<vmem>>, vector<1x32xf32>
    tpu.vector_store %arg3[%c4_13, %c0_14], %18 {strides = array<i32>} : memref<8x32xf32, #tpu.memory_space<vmem>>, vector<1x32xf32>,
    %c5 = arith.constant 5 : index
    %20 = memref.load %arg0[%c5] : memref<8xi32, #tpu.memory_space<smem>>
    %21 = arith.index_cast %20 : i32 to index
    %c0_15 = arith.constant 0 : index
    %22 = vector.load %arg1[%21, %c0_15] : memref<8x32xf32, #tpu.memory_space<vmem>>, vector<1x32xf32>
    %c5_16 = arith.constant 5 : index
    %c0_17 = arith.constant 0 : index
    %23 = vector.load %arg3[%c5_16, %c0_17] : memref<8x32xf32, #tpu.memory_space<vmem>>, vector<1x32xf32>
    tpu.vector_store %arg3[%c5_16, %c0_17], %22 {strides = array<i32>} : memref<8x32xf32, #tpu.memory_space<vmem>>, vector<1x32xf32>,
    %c6 = arith.constant 6 : index
    %24 = memref.load %arg0[%c6] : memref<8xi32, #tpu.memory_space<smem>>
    %25 = arith.index_cast %24 : i32 to index
    %c0_18 = arith.constant 0 : index
    %26 = vector.load %arg1[%25, %c0_18] : memref<8x32xf32, #tpu.memory_space<vmem>>, vector<1x32xf32>
    %c6_19 = arith.constant 6 : index
    %c0_20 = arith.constant 0 : index
    %27 = vector.load %arg3[%c6_19, %c0_20] : memref<8x32xf32, #tpu.memory_space<vmem>>, vector<1x32xf32>
    tpu.vector_store %arg3[%c6_19, %c0_20], %26 {strides = array<i32>} : memref<8x32xf32, #tpu.memory_space<vmem>>, vector<1x32xf32>,
    %c7 = arith.constant 7 : index
    %28 = memref.load %arg0[%c7] : memref<8xi32, #tpu.memory_space<smem>>
    %29 = arith.index_cast %28 : i32 to index
    %c0_21 = arith.constant 0 : index
    %30 = vector.load %arg1[%29, %c0_21] : memref<8x32xf32, #tpu.memory_space<vmem>>, vector<1x32xf32>
    %c7_22 = arith.constant 7 : index
    %c0_23 = arith.constant 0 : index
    %31 = vector.load %arg3[%c7_22, %c0_23] : memref<8x32xf32, #tpu.memory_space<vmem>>, vector<1x32xf32>
    tpu.vector_store %arg3[%c7_22, %c0_23], %30 {strides = array<i32>} : memref<8x32xf32, #tpu.memory_space<vmem>>, vector<1x32xf32>,
    %c0_24 = arith.constant 0 : index
    %c0_25 = arith.constant 0 : index
    %32 = vector.load %arg3[%c0_24, %c0_25] : memref<8x32xf32, #tpu.memory_space<vmem>>, vector<8x32xf32>
    %33 = vector.extract_strided_slice %32 {offsets = [0, 0], sizes = [1, 32], strides = [1, 1]} : vector<8x32xf32> to vector<1x32xf32>
    %34 = arith.mulf %32, %32 : vector<8x32xf32>
    %cst = arith.constant dense<0.000000e+00> : vector<8xf32>
    %35 = vector.multi_reduction <add>, %34, %cst [1] : vector<8x32xf32> to vector<8xf32>
    %36 = vector.shape_cast %35 : vector<8xf32> to vector<8x1xf32>
    %37 = vector.broadcast %33 : vector<1x32xf32> to vector<8x32xf32>
    %38 = arith.mulf %37, %32 : vector<8x32xf32>
    %cst_26 = arith.constant dense<0.000000e+00> : vector<8xf32>
    %39 = vector.multi_reduction <add>, %38, %cst_26 [1] : vector<8x32xf32> to vector<8xf32>
    %40 = vector.shape_cast %39 : vector<8xf32> to vector<8x1xf32>
    %41 = vector.extract_strided_slice %36 {offsets = [0, 0], sizes = [1, 1], strides = [1, 1]} : vector<8x1xf32> to vector<1x1xf32>
    %42 = vector.broadcast %41 : vector<1x1xf32> to vector<8x1xf32>
    %43 = arith.mulf %42, %36 : vector<8x1xf32>
    %cst_27 = arith.constant 1.000000e-16 : f32
    %44 = vector.broadcast %cst_27 : f32 to vector<8x1xf32>
    %45 = arith.maximumf %43, %44 : vector<8x1xf32>
    %46 = math.rsqrt %45 : vector<8x1xf32>
    %47 = arith.mulf %40, %46 : vector<8x1xf32>
    %48 = vector.extract_strided_slice %47 {offsets = [1, 0], sizes = [1, 1], strides = [1, 1]} : vector<8x1xf32> to vector<1x1xf32>
    %49 = vector.extract_strided_slice %47 {offsets = [2, 0], sizes = [6, 1], strides = [1, 1]} : vector<8x1xf32> to vector<6x1xf32>
    %cst_28 = arith.constant dense<0.000000e+00> : vector<1xf32>
    %50 = vector.multi_reduction <add>, %49, %cst_28 [0] : vector<6x1xf32> to vector<1xf32>
    %51 = vector.shape_cast %50 : vector<1xf32> to vector<1x1xf32>
    %cst_29 = arith.constant 6.000000e+00 : f32
    %52 = vector.broadcast %cst_29 : f32 to vector<1x1xf32>
    %53 = arith.divf %51, %52 : vector<1x1xf32>
    %54 = arith.subf %48, %53 : vector<1x1xf32>
    %cst_30 = arith.constant 1.000000e+00 : f32
    %55 = vector.broadcast %cst_30 : f32 to vector<1x1xf32>
    %56 = arith.subf %54, %55 : vector<1x1xf32>
    %57 = arith.mulf %56, %56 : vector<1x1xf32>
    %cst_31 = arith.constant 1.000000e+00 : f32
    %cst_32 = arith.constant 1.000000e-07 : f32
    %58 = arith.subf %cst_31, %cst_32 : f32
    %cst_33 = arith.constant 0.000000e+00 : f32
    %59 = vector.broadcast %cst_33 : f32 to vector<1x1xf32>
    %60 = arith.maximumf %59, %57 : vector<1x1xf32>
    %61 = vector.broadcast %58 : f32 to vector<1x1xf32>
    %62 = arith.minimumf %61, %60 : vector<1x1xf32>
    %cst_34 = arith.constant 1.000000e+00 : f32
    %63 = vector.broadcast %cst_34 : f32 to vector<1x1xf32>
    %64 = arith.subf %63, %62 : vector<1x1xf32>
    %65 = math.log %64 : vector<1x1xf32>
    %cst_35 = arith.constant 0.000000e+00 : f32
    %66 = vector.broadcast %cst_35 : f32 to vector<1x1xf32>
    %67 = arith.subf %66, %65 : vector<1x1xf32>
    %c0_36 = arith.constant 0 : index
    %c0_37 = arith.constant 0 : index
    %68 = vector.load %arg2[%c0_36, %c0_37] : memref<1x1xf32, #tpu.memory_space<vmem>>, vector<1x1xf32>
    tpu.vector_store %arg2[%c0_36, %c0_37], %67 {strides = array<i32>} : memref<1x1xf32, #tpu.memory_space<vmem>>, vector<1x1xf32>,
    return
  }
}

</mosaic_0001>

<llo_original>
// kernel: mpcl_pallas_last.1
$region0: #{mpcl_pallas_last.1}
  #allocation0 [shape = 'u32[]', space=smem, size = 0x4, offset = 0x4, fixed_abs, tag = 'smem constant byte address 0x4 - core index']
  #allocation1 [shape = 'u32[144,128]{1,0:T(1,128)}', space=vmem, size = 0x12000, scoped, tag = 'internal scratch']
  #allocation2 [shape = 'f32[8,32]{1,0:T(8,128)}', space=vmem, size = 0x1000, scoped, tag = 'scratch operand']
  %s0 = inlined_call_operand.vmem [shape: s32[8], index: 0, kind: input, shape index: {}]
  %s1 = inlined_call_operand.hbm [shape: f32[8,32], index: 1, kind: input, shape index: {}]
  %s2 = inlined_call_operand.hbm [shape: f32[1,1], index: 2, kind: output, shape index: {}]
  %s3 = sld [smem:[#allocation0]]
  $region26: #{mpcl_pallas_last.1} parent=0
    _
  %s5 = ssub.s32 1, %s3
  %s6 = scalar_select 0, %s5, %s3
  $region1: #{mpcl_pallas_last.1} parent=0
    #allocation3 [shape = 'u8[512]{0}', space=smem, size = 0x200, scoped, tag = 'input window, operand 0, single buffered']
    #allocation4 [shape = 's32[1]{0}', space=sflag, size = 0x4, scoped, tag = 'scoped memory for mpcl_pallas_last.1']
    #allocation5 [shape = 's32[1]{0}', space=sflag, size = 0x4, scoped, tag = 'scoped memory for mpcl_pallas_last.1']
    #allocation6 [shape = 's32[1]{0}', space=sflag, size = 0x4, scoped, tag = 'scoped memory for mpcl_pallas_last.1']
    #allocation7 [shape = 'u8[4096]{0}', space=vmem, size = 0x1000, scoped, tag = 'input window, operand 1, single buffered']
    #allocation8 [shape = 'u8[512]{0}', space=vmem, size = 0x400, scoped, tag = 'output window, operand 0, single buffered']
    %7 = vsyncpa [#allocation6], 0
    %8 = vsyncpa [#allocation4], 0
    %9 = vsyncpa [#allocation5], 0
    // Predicated region
    $region2: #{mpcl_pallas_last.1} parent=1 // pred_check
      _
    $region3: #{mpcl_pallas_last.1} parent=1 // pred_check_branch
      %11 = sbr.rel (0) target = $region5
    $region4: #{mpcl_pallas_last.1} parent=1 // pred_region
      %s13 = ssub.s32 16, 16
      %14 = vsyncadd [#allocation6], %s13
      %s16 = sshll.u32 %s0, 4
      %s17 = int_to_ptr.vmem [resolvable:$true] %s16
      %19 = dma.vmem_to_smem %s17, 16, [#allocation3], [#allocation6]
    $region5: #{mpcl_pallas_last.1} parent=1 // pred_fallthru
      _
    // Predicated region
    $region6: #{mpcl_pallas_last.1} parent=1 // pred_check
      _
    $region7: #{mpcl_pallas_last.1} parent=1 // pred_check_branch
      %21 = sbr.rel (0) target = $region9
    $region8: #{mpcl_pallas_last.1} parent=1 // pred_region
      %s23 = ssub.s32 128, 128
      %24 = vsyncadd [#allocation4], %s23
      %s26 = sshll.u32 [#allocation7], 4
      %s27 = int_to_ptr.vmem [resolvable:$true] %s26
      %29 = dma.hbm_to_vmem [thread:$0]  %s1, 128, %s27, [#allocation4]
    $region9: #{mpcl_pallas_last.1} parent=1 // pred_fallthru
      _
    // Predicated region
    $region10: #{mpcl_pallas_last.1} parent=1 // pred_check
      _
    $region11: #{mpcl_pallas_last.1} parent=1 // pred_check_branch
      %31 = sbr.rel (0) target = $region13
    $region12: #{mpcl_pallas_last.1} parent=1 // pred_region
      %32 = dma.done [#allocation6], 16
    $region13: #{mpcl_pallas_last.1} parent=1 // pred_fallthru
      _
    // Predicated region
    $region14: #{mpcl_pallas_last.1} parent=1 // pred_check
      _
    $region15: #{mpcl_pallas_last.1} parent=1 // pred_check_branch
      %34 = sbr.rel (0) target = $region17
    $region16: #{mpcl_pallas_last.1} parent=1 // pred_region
      %35 = dma.done [#allocation4], 128
    $region17: #{mpcl_pallas_last.1} parent=1 // pred_fallthru
      _
    %36 = sfence
    %s37 = sld [smem:[#allocation3]]
    %s38 = scalar_lea.vmem [#allocation7], %s37
    %v39 = vld [vmem:[%s38] sm:$0x1]
    %vm40 = vcmask 253952
    %41 = vst.msk [vmem:[#allocation2] sm:$0x1] %vm40, %v39
    %s42 = sld [smem:[#allocation3 + $0x1]]
    %s43 = scalar_lea.vmem [#allocation7], %s42
    %v44 = vld [vmem:[%s43] sm:$0x1]
    %45 = vst.msk [vmem:[#allocation2 + $0x1] sm:$0x1] %vm40, %v44
    %s46 = sld [smem:[#allocation3 + $0x2]]
    %s47 = scalar_lea.vmem [#allocation7], %s46
    %v48 = vld [vmem:[%s47] sm:$0x1]
    %49 = vst.msk [vmem:[#allocation2 + $0x2] sm:$0x1] %vm40, %v48
    %s50 = sld [smem:[#allocation3 + $0x3]]
    %s51 = scalar_lea.vmem [#allocation7], %s50
    %v52 = vld [vmem:[%s51] sm:$0x1]
    %53 = vst.msk [vmem:[#allocation2 + $0x3] sm:$0x1] %vm40, %v52
    %s54 = sld [smem:[#allocation3 + $0x4]]
    %s55 = scalar_lea.vmem [#allocation7], %s54
    %v56 = vld [vmem:[%s55] sm:$0x1]
    %57 = vst.msk [vmem:[#allocation2 + $0x4] sm:$0x1] %vm40, %v56
    %s58 = sld [smem:[#allocation3 + $0x5]]
    %s59 = scalar_lea.vmem [#allocation7], %s58
    %v60 = vld [vmem:[%s59] sm:$0x1]
    %61 = vst.msk [vmem:[#allocation2 + $0x5] sm:$0x1] %vm40, %v60
    %s62 = sld [smem:[#allocation3 + $0x6]]
    %s63 = scalar_lea.vmem [#allocation7], %s62
    %v64 = vld [vmem:[%s63] sm:$0x1]
    %65 = vst.msk [vmem:[#allocation2 + $0x6] sm:$0x1] %vm40, %v64
    %s66 = sld [smem:[#allocation3 + $0x7]]
    %s67 = scalar_lea.vmem [#allocation7], %s66
    %v68 = vld [vmem:[%s67] sm:$0x1]
    %69 = vst.msk [vmem:[#allocation2 + $0x7] sm:$0x1] %vm40, %v68
    %v70 = vld [vmem:[#allocation2] sm:$0xff]
    %v71 = vmul.f32 %v70, %v70
    %vm72 = vcmask 261120
    %v73 = vsel %vm72, %v71, 0.0
    %74 = vadd.xlane.f32.xlu0 %v73
    %v75 = vpop.xlane.xlu0 %74
    %v76 = vlaneseq
    %v77 = vshrl.u32 %v76, 7
    %v78 = vsub.s32 0, %v77
    %v79 = vrot.slane %v70, %v78
    %v80 = vmul.f32 %v79, %v70
    %v81 = vsel %vm72, %v80, 0.0
    %82 = vadd.xlane.f32.xlu0 %v81
    %v83 = vpop.xlane.xlu0 %82
    %v84 = vlaneseq
    %v85 = vshrl.u32 %v84, 7
    %v86 = vsub.s32 0, %v85
    %v87 = vrot.slane %v75, %v86
    %v88 = vmul.f32 %v87, %v75
    %v89 = vmax.f32 %v88, 1e-16
    %v90 = vrsqrt.pop %v89
    %v91 = vmul.f32 %v83, %v90
    %v93 = vrot.slane %v91, 2
    %vm95 = vcmask 1045504
    %v96 = vsel %vm95, %v93, 0.0
    %v97 = vrot.slane %v96, 4
    %v98 = vadd.f32 %v96, %v97
    %v99 = vrot.slane %v98, 2
    %v100 = vadd.f32 %v98, %v99
    %v101 = vrot.slane %v100, 1
    %v102 = vadd.f32 %v100, %v101
    %v103 = vrcp.pop 6.0
    %v104 = vmul.f32 %v102, %v103
    %v105 = vsub.f32 %v91, %v104
    %v106 = vsub.f32 %v105, 1.0
    %v107 = vmul.f32 %v106, %v106
    %v108 = vmax.f32 %v107, 0.0
    %v109 = vmin.f32 %v108, 0.9999999
    %v110 = vsub.f32 1.0, %v109
    %v111 = vlog2.pop %v110
    %v112 = vmul.f32 %v111, 0.6931472
    %v113 = vsub.f32 0.0, %v112
    %vm114 = vcmask 1025
    %115 = vst.msk [vmem:[#allocation8 - $0x1] sm:$0x2] %vm114, %v113
    // Predicated region
    $region18: #{mpcl_pallas_last.1} parent=1 // pred_check
      _
    $region19: #{mpcl_pallas_last.1} parent=1 // pred_check_branch
      %117 = sbr.rel (0) target = $region21
    $region20: #{mpcl_pallas_last.1} parent=1 // pred_region
      %s119 = ssub.s32 16, 16
      %120 = vsyncadd [#allocation5], %s119
      %s122 = sshll.u32 [#allocation8], 4
      %s123 = int_to_ptr.vmem [resolvable:$true] %s122
      %125 = dma.vmem_to_hbm [thread:$0]  %s123, 16, %s2, [#allocation5]
    $region21: #{mpcl_pallas_last.1} parent=1 // pred_fallthru
      _
    // Predicated region
    $region22: #{mpcl_pallas_last.1} parent=1 // pred_check
      _
    $region23: #{mpcl_pallas_last.1} parent=1 // pred_check_branch
      %127 = sbr.rel (0) target = $region25
    $region24: #{mpcl_pallas_last.1} parent=1 // pred_region
      %128 = dma.done [#allocation5], 16
    $region25: #{mpcl_pallas_last.1} parent=1 // pred_fallthru
      _
    %129 = vsyncpa [#allocation4], 1
    %130 = vsyncpa [#allocation5], 1
    %131 = vsyncpa [#allocation6], 1

</llo_original>
